<compile_context>
chip_gen: v6e
topology: v6e:2x2x1
jax: 0.10.0
libtpu: 0.0.40
codegen_flags: <defaults>
</compile_context>

<pallas_src>
import jax
import jax.numpy as jnp
from jax.experimental import pallas as pl
from jax.experimental.pallas import tpu as pltpu

_N_PAD = 8  # narrow lane padding for the 3-wide output (was 128)


def linear_relu_kernel(x_ref, w_ref, b_ref, o_ref):
    # x_ref: (TM, D) compute_dtype   w_ref: (D, 8) compute_dtype
    # b_ref: (1, 8) f32              o_ref: (TM, 8) f32
    acc = jnp.dot(x_ref[...], w_ref[...], preferred_element_type=jnp.float32)
    o_ref[...] = jnp.maximum(acc + b_ref[...], 0.0)  # bias broadcast + ReLU


def torch_model_forward(x, weight, bias, *, block_rows=4096, min_grid_steps=4,
                        compute_dtype=jnp.bfloat16):
    """Pallas forward for TorchModel (y=None branch).

    x:      (B, D) float
    weight: (3, D) float32  -- torch nn.Linear.weight layout
    bias:   (3,)   float32
    returns (B, 3) float32
    """
    x = jnp.asarray(x)
    weight = jnp.asarray(weight, jnp.float32)
    bias = jnp.asarray(bias, jnp.float32)

    B, D = x.shape
    out_dim = weight.shape[0]

    # Fold transpose + (tiny) lane padding into one constant-prep step.
    # Padded columns are zero, so cols 3..7 of the output are exactly 0.
    w_pad = (jnp.zeros((D, _N_PAD), jnp.float32)
             .at[:, :out_dim].set(weight.T)).astype(compute_dtype)
    b_pad = jnp.zeros((1, _N_PAD), jnp.float32).at[0, :out_dim].set(bias)
    x_c = x.astype(compute_dtype)  # fuses with the producer under jit

    # Batch tile: multiple of 8, at least `min_grid_steps` grid steps (keeps
    # both v7x TensorCores busy), capped at block_rows.  Double-buffered
    # working set at tm=4096 is < 3 MiB -> safe for v5e's 16 MiB scoped VMEM.
    tm = pl.cdiv(B, min_grid_steps)
    tm = ((tm + 7) // 8) * 8
    tm = int(max(8, min(block_rows, tm)))
    grid = (pl.cdiv(B, tm),)

    itemsize = jnp.dtype(compute_dtype).itemsize
    cost = pl.CostEstimate(
        flops=2 * B * D * _N_PAD,
        transcendentals=0,
        bytes_accessed=(B * D * itemsize        # x read
                        + D * _N_PAD * itemsize  # weight
                        + _N_PAD * 4             # bias
                        + B * _N_PAD * 4),       # output write
    )

    out = pl.pallas_call(
        linear_relu_kernel,
        out_shape=jax.ShapeDtypeStruct((B, _N_PAD), jnp.float32),
        grid_spec=pl.GridSpec(
            grid=grid,
            in_specs=[
                pl.BlockSpec((tm, D), lambda i: (i, 0)),        # x tile (pipelined)
                pl.BlockSpec((D, _N_PAD), lambda i: (0, 0)),    # weight (resident)
                pl.BlockSpec((1, _N_PAD), lambda i: (0, 0)),    # bias (resident)
            ],
            out_specs=pl.BlockSpec((tm, _N_PAD), lambda i: (i, 0)),
        ),
        compiler_params=pltpu.CompilerParams(
            dimension_semantics=("parallel",),  # shards batch across TCs on v7x
        ),
        cost_estimate=cost,
    )(x_c, w_pad, b_pad)

    return out[:, :out_dim]


# TODO(synk): the y-is-not-None branch (cross_entropy over the ReLU'd logits)
# is a scalar training-loss path; it is not part of the Pallas hot path and
# would be computed in plain JAX if needed.


if __name__ == "__main__":
    key = jax.random.PRNGKey(0)
    kx, kw, kb, kx2 = jax.random.split(key, 4)

    batch, input_size = 256, 32  # small shapes consistent with the module

    x = jax.random.normal(kx, (batch, input_size), dtype=jnp.float32)
    # Deterministic parameter init (mimics nn.Linear uniform init bounds).
    bound = 1.0 / (input_size ** 0.5)
    weight = jax.random.uniform(kw, (3, input_size), minval=-bound, maxval=bound,
                                dtype=jnp.float32)
    bias = jax.random.uniform(kb, (3,), minval=-bound, maxval=bound,
                              dtype=jnp.float32)

    ref = jnp.maximum(x @ weight.T + bias, 0.0)

    # Default perf configuration: bf16 inputs, f32 accumulation; grid of 4
    # parallel batch tiles (tm=64) for this small batch.
    y_pred = torch_model_forward(x, weight, bias)
    jax.block_until_ready(y_pred)
    assert y_pred.shape == (batch, 3)
    assert jnp.allclose(y_pred, ref, atol=3e-2, rtol=3e-2)

    # f32 path: exact parity with the torch reference.
    y_f32 = torch_model_forward(x, weight, bias, compute_dtype=jnp.float32)
    jax.block_until_ready(y_f32)
    assert jnp.allclose(y_f32, ref, atol=1e-5, rtol=1e-5)

    # Ragged batch (B not a multiple of the tile) exercises the partial final
    # block path (no jnp.pad copy of x).
    x2 = jax.random.normal(kx2, (13, input_size), dtype=jnp.float32)
    y2 = torch_model_forward(x2, weight, bias, compute_dtype=jnp.float32)
    jax.block_until_ready(y2)
    ref2 = jnp.maximum(x2 @ weight.T + bias, 0.0)
    assert y2.shape == (13, 3)
    assert jnp.allclose(y2, ref2, atol=1e-5, rtol=1e-5)

    print("KERNEL_OK")
</pallas_src>

<mosaic_0001>
module attributes {stable_mosaic.version = 11 : i64} {
  func.func @linear_relu_kernel(%arg0: i32, %arg1: memref<64x32xbf16, #tpu.memory_space<vmem>>, %arg2: memref<32x8xbf16, #tpu.memory_space<vmem>>, %arg3: memref<1x8xf32, #tpu.memory_space<vmem>>, %arg4: memref<64x8xf32, #tpu.memory_space<vmem>>) attributes {dimension_semantics = [#tpu.dimension_semantics<parallel>], iteration_bounds = array<i64: 4>, scalar_prefetch = 0 : i64, scratch_operands = 0 : i64, tpu.core_type = #tpu.core_type<tc>, window_params = [{transform_indices = @transform_0, window_bounds = array<i64: 64, 32>}, {pipeline_mode = #tpu.pipeline_mode<synchronous>, transform_indices = @transform_1, window_bounds = array<i64: 32, 8>}, {pipeline_mode = #tpu.pipeline_mode<synchronous>, transform_indices = @transform_2, window_bounds = array<i64: 1, 8>}, {transform_indices = @transform_3, window_bounds = array<i64: 64, 8>}]} {
    %c0 = arith.constant 0 : index
    %c0_0 = arith.constant 0 : index
    %0 = vector.load %arg1[%c0, %c0_0] : memref<64x32xbf16, #tpu.memory_space<vmem>>, vector<64x32xbf16>
    %c0_1 = arith.constant 0 : index
    %c0_2 = arith.constant 0 : index
    %1 = vector.load %arg2[%c0_1, %c0_2] : memref<32x8xbf16, #tpu.memory_space<vmem>>, vector<32x8xbf16>
    %cst = arith.constant dense<0.000000e+00> : vector<64x8xf32>
    %2 = tpu.matmul %0, %1, %cst {dimension_numbers = #tpu.dot_dimension_numbers<[1], [0], [0], [1], [0, 0, 1, 1], [], []>} : vector<64x32xbf16>, vector<32x8xbf16>, vector<64x8xf32> -> vector<64x8xf32>
    %c0_3 = arith.constant 0 : index
    %c0_4 = arith.constant 0 : index
    %3 = vector.load %arg3[%c0_3, %c0_4] : memref<1x8xf32, #tpu.memory_space<vmem>>, vector<1x8xf32>
    %4 = vector.broadcast %3 : vector<1x8xf32> to vector<64x8xf32>
    %5 = arith.addf %2, %4 : vector<64x8xf32>
    %cst_5 = arith.constant 0.000000e+00 : f32
    %6 = vector.broadcast %cst_5 : f32 to vector<64x8xf32>
    %7 = arith.maximumf %5, %6 : vector<64x8xf32>
    %c0_6 = arith.constant 0 : index
    %c0_7 = arith.constant 0 : index
    %8 = vector.load %arg4[%c0_6, %c0_7] : memref<64x8xf32, #tpu.memory_space<vmem>>, vector<64x8xf32>
    tpu.vector_store %arg4[%c0_6, %c0_7], %7 {strides = array<i32>} : memref<64x8xf32, #tpu.memory_space<vmem>>, vector<64x8xf32>,
    return
  }
  func.func @transform_0(%arg0: i32) -> (i32, i32) {
    %c0_i32 = arith.constant 0 : i32
    %c0_i32_0 = arith.constant 0 : i32
    return %arg0, %c0_i32 : i32, i32
  }
  func.func @transform_1(%arg0: i32) -> (i32, i32) {
    %c0_i32 = arith.constant 0 : i32
    %c0_i32_0 = arith.constant 0 : i32
    %c0_i32_1 = arith.constant 0 : i32
    return %c0_i32, %c0_i32_0 : i32, i32
  }
  func.func @transform_2(%arg0: i32) -> (i32, i32) {
    %c0_i32 = arith.constant 0 : i32
    %c0_i32_0 = arith.constant 0 : i32
    %c0_i32_1 = arith.constant 0 : i32
    return %c0_i32, %c0_i32_0 : i32, i32
  }
  func.func @transform_3(%arg0: i32) -> (i32, i32) {
    %c0_i32 = arith.constant 0 : i32
    %c0_i32_0 = arith.constant 0 : i32
    return %arg0, %c0_i32 : i32, i32
  }
}

</mosaic_0001>

<llo_original>
// kernel: tpu_custom_call.1
$region0: #{tpu_custom_call.1}
  #allocation0 [shape = 'u32[]', space=smem, size = 0x4, offset = 0x4, fixed_abs, tag = 'smem constant byte address 0x4 - core index']
  #allocation1 [shape = 'u32[144,128]{1,0:T(1,128)}', space=vmem, size = 0x12000, scoped, tag = 'internal scratch']
  %s0 = inlined_call_operand.vmem [shape: bf16[256,32], index: 0, kind: input, shape index: {}]
  %s1 = inlined_call_operand.vmem [shape: bf16[32,8], index: 1, kind: input, shape index: {}]
  %s2 = inlined_call_operand.vmem [shape: f32[1,8], index: 2, kind: input, shape index: {}]
  %s3 = inlined_call_operand.vmem [shape: f32[256,8], index: 3, kind: output, shape index: {}]
  %s4 = sld [smem:[#allocation0]]
  $region45: #{tpu_custom_call.1} parent=0
    _
  %s6 = ssub.s32 1, %s4
  %s7 = scalar_select 0, %s6, %s4
  loop: start=0, step=1, limit=6
  $region2: #{tpu_custom_call.1} parent=0 // loop_pre_header
    _
  $region3: #{tpu_custom_call.1} parent=0 // loop_header
    %s9 = sphi 0, %s13
    %p10 = scmp.ge.s32.totalorder %s9, 6
    %s19 = sphi 0, %s21
    %s22 = sphi 0, %s19
    %s23 = sphi 0, %s22
    %s39 = sphi 0, %s23
    %s43 = sphi 0, %s43
    %s45 = sphi 0, %s43
    %s46 = sphi 0, %s45
    %s60 = sphi 0, %s46
    %s64 = sphi 0, %s64
    %s66 = sphi 0, %s64
    %s67 = sphi 0, %s66
    %s81 = sphi 0, %s67
    %s87 = sphi 0, %s89
    %s90 = sphi 0, %s87
    %s91 = sphi 0, %s90
    %s107 = sphi 0, %s91
  $region4: #{tpu_custom_call.1} parent=0 // loop_header_branch
    %12 = sbr.rel (%p10) target = $region8
  $region5: #{tpu_custom_call.1} parent=0 // loop_body
    %s14 = ssub.s32 %s9, 1
    %s15 = ssub.s32 %s9, 2
    %s16 = sadd.s32 %s9, 1
    %s17 = ssub.s32 %s9, %s16
    %p18 = scmp.eq.s32.totalorder %s17, 0
    %s20 = sadd.s32 %s19, 1
    %s21 = scalar_select %p18, %s19, %s20
    %p24 = pneg %p18
    %p25 = scmp.eq.s32.totalorder %s9, 3
    %p26 = por %p24, %p25
    %p27 = scmp.ne.s32.totalorder %s19, %s22
    %p28 = scmp.eq.s32.totalorder %s9, 0
    %p29 = por %p27, %p28
    %p30 = scmp.ne.s32.totalorder %s19, %s22
    %p31 = scmp.eq.s32.totalorder %s14, 3
    %p32 = por %p30, %p31
    %p33 = scmp.ne.s32.totalorder %s22, %s23
    %p34 = scmp.eq.s32.totalorder %s14, 0
    %p35 = por %p33, %p34
    %p36 = scmp.ne.s32.totalorder %s22, %s23
    %p37 = scmp.eq.s32.totalorder %s15, 3
    %p38 = por %p36, %p37
    %p40 = scmp.ne.s32.totalorder %s23, %s39
    %p41 = scmp.eq.s32.totalorder %s15, 0
    %p42 = por %p40, %p41
    %s44 = sadd.s32 %s43, 1
    %p47 = scmp.eq.s32.totalorder %s9, 3
    %p48 = scmp.ne.s32.totalorder %s43, %s45
    %p49 = scmp.eq.s32.totalorder %s9, 0
    %p50 = por %p48, %p49
    %p51 = scmp.ne.s32.totalorder %s43, %s45
    %p52 = scmp.eq.s32.totalorder %s14, 3
    %p53 = por %p51, %p52
    %p54 = scmp.ne.s32.totalorder %s45, %s46
    %p55 = scmp.eq.s32.totalorder %s14, 0
    %p56 = por %p54, %p55
    %p57 = scmp.ne.s32.totalorder %s45, %s46
    %p58 = scmp.eq.s32.totalorder %s15, 3
    %p59 = por %p57, %p58
    %p61 = scmp.ne.s32.totalorder %s46, %s60
    %p62 = scmp.eq.s32.totalorder %s15, 0
    %p63 = por %p61, %p62
    %s65 = sadd.s32 %s64, 1
    %p68 = scmp.eq.s32.totalorder %s9, 3
    %p69 = scmp.ne.s32.totalorder %s64, %s66
    %p70 = scmp.eq.s32.totalorder %s9, 0
    %p71 = por %p69, %p70
    %p72 = scmp.ne.s32.totalorder %s64, %s66
    %p73 = scmp.eq.s32.totalorder %s14, 3
    %p74 = por %p72, %p73
    %p75 = scmp.ne.s32.totalorder %s66, %s67
    %p76 = scmp.eq.s32.totalorder %s14, 0
    %p77 = por %p75, %p76
    %p78 = scmp.ne.s32.totalorder %s66, %s67
    %p79 = scmp.eq.s32.totalorder %s15, 3
    %p80 = por %p78, %p79
    %p82 = scmp.ne.s32.totalorder %s67, %s81
    %p83 = scmp.eq.s32.totalorder %s15, 0
    %p84 = por %p82, %p83
    %s85 = ssub.s32 %s9, %s16
    %p86 = scmp.eq.s32.totalorder %s85, 0
    %s88 = sadd.s32 %s87, 1
    %s89 = scalar_select %p86, %s87, %s88
    %p92 = pneg %p86
    %p93 = scmp.eq.s32.totalorder %s9, 3
    %p94 = por %p92, %p93
    %p95 = scmp.ne.s32.totalorder %s87, %s90
    %p96 = scmp.eq.s32.totalorder %s9, 0
    %p97 = por %p95, %p96
    %p98 = scmp.ne.s32.totalorder %s87, %s90
    %p99 = scmp.eq.s32.totalorder %s14, 3
    %p100 = por %p98, %p99
    %p101 = scmp.ne.s32.totalorder %s90, %s91
    %p102 = scmp.eq.s32.totalorder %s14, 0
    %p103 = por %p101, %p102
    %p104 = scmp.ne.s32.totalorder %s90, %s91
    %p105 = scmp.eq.s32.totalorder %s15, 3
    %p106 = por %p104, %p105
    %p108 = scmp.ne.s32.totalorder %s91, %s107
    %p109 = scmp.eq.s32.totalorder %s15, 0
    %p110 = por %p108, %p109
    %p111 = scmp.le.s32.totalorder 1, %s9
    %p112 = scmp.lt.s32.totalorder %s9, 5
    %p113 = pnand %p111, %p112
    %p114 = pneg %p113
    // Predicated region
    $region9: #{tpu_custom_call.1} parent=5 // pred_check
      _
    $region10: #{tpu_custom_call.1} parent=5 // pred_check_branch
      %116 = sbr.rel (%p113) target = $region12
    $region11: #{tpu_custom_call.1} parent=5 // pred_region
      %s117 = ssub.s32 %s9, 1
      // Predicated region
      $region13: #{tpu_custom_call.1} parent=11 // pred_check
        %p118 = pneg %p56
      $region14: #{tpu_custom_call.1} parent=11 // pred_check_branch
        %120 = sbr.rel (%p118) target = $region16
      $region15: #{tpu_custom_call.1} parent=11 // pred_region
        _
      $region16: #{tpu_custom_call.1} parent=11 // pred_fallthru
        _
      // Predicated region
      $region17: #{tpu_custom_call.1} parent=11 // pred_check
        %p121 = pneg %p77
      $region18: #{tpu_custom_call.1} parent=11 // pred_check_branch
        %123 = sbr.rel (%p121) target = $region20
      $region19: #{tpu_custom_call.1} parent=11 // pred_region
        _
      $region20: #{tpu_custom_call.1} parent=11 // pred_fallthru
        _
    $region12: #{tpu_custom_call.1} parent=5 // pred_fallthru
      _
    %p124 = scmp.lt.s32.totalorder %s9, 4
    // Predicated region
    $region21: #{tpu_custom_call.1} parent=5 // pred_check
      %p125 = pneg %p124
    $region22: #{tpu_custom_call.1} parent=5 // pred_check_branch
      %127 = sbr.rel (%p125) target = $region24
    $region23: #{tpu_custom_call.1} parent=5 // pred_region
      // Predicated region
      $region25: #{tpu_custom_call.1} parent=23 // pred_check
        %p128 = pneg %p29
      $region26: #{tpu_custom_call.1} parent=23 // pred_check_branch
        %130 = sbr.rel (%p128) target = $region28
      $region27: #{tpu_custom_call.1} parent=23 // pred_region
        %s131 = smul.u32 8, %s9
        %p132 = scmp.lt.s32.totalorder %s131, 31
        %s133 = scalar_select %p132, %s131, 31
        %s134 = smul.addr %s133, 4
        %s135 = scalar_lea.vmem %s0, %s134
        %s136 = smul.u32 8, %s9
      $region28: #{tpu_custom_call.1} parent=23 // pred_fallthru
        _
    $region24: #{tpu_custom_call.1} parent=5 // pred_fallthru
      _
    %p137 = scmp.le.s32.totalorder 1, %s9
    %p138 = scmp.lt.s32.totalorder %s9, 5
    %p139 = pnand %p137, %p138
    %p140 = pneg %p139
    // Predicated region
    $region29: #{tpu_custom_call.1} parent=5 // pred_check
      _
    $region30: #{tpu_custom_call.1} parent=5 // pred_check_branch
      %142 = sbr.rel (%p139) target = $region32
    $region31: #{tpu_custom_call.1} parent=5 // pred_region
      %s143 = ssub.s32 %s9, 1
      %s144 = smul.u32 8, %s14
      %p145 = scmp.lt.s32.totalorder %s144, 31
      %s146 = scalar_select %p145, %s144, 31
      %s147 = smul.addr %s146, 4
      %s148 = scalar_lea.vmem %s0, %s147
      %p149 = pneg %p35
      %p150 = pneg %p32
      %p151 = pneg %p56
      %p152 = pneg %p53
      %p153 = pneg %p77
      %p154 = pneg %p74
      %p155 = pneg %p103
      %p156 = pneg %p100
      %s157 = smul.u32 8, %s14
      %p158 = scmp.lt.s32.totalorder %s157, 31
      %s159 = scalar_select %p158, %s157, 31
      %s160 = smul.addr %s159, 8
      %s161 = scalar_lea.vmem %s3, %s160
      %s162 = smul.u32 8, %s14
      %p163 = scmp.lt.s32.totalorder %s162, 31
      %s164 = scalar_select %p163, %s162, 31
      %s165 = smul.addr %s164, 4
      %s166 = scalar_lea.vmem %s0, %s165
      %s167 = smul.u32 8, %s14
      %s168 = smul.u32 8, %s14
      %p169 = scmp.lt.s32.totalorder %s168, 31
      %s170 = scalar_select %p169, %s168, 31
      %s171 = smul.addr %s170, 8
      %s172 = scalar_lea.vmem %s3, %s171
      %s173 = smul.u32 8, %s14
      %v175 = vld [vmem:[%s166] sm:$0xf]
      %v176 = vld [vmem:[%s166 + $0x4] sm:$0xf]
      %v177 = vld [vmem:[%s166 + $0x8] sm:$0xf]
      %v178 = vld [vmem:[%s166 + $0xc] sm:$0xf]
      %v179 = vld [vmem:[%s166 + $0x10] sm:$0xf]
      %v180 = vld [vmem:[%s166 + $0x14] sm:$0xf]
      %v181 = vld [vmem:[%s166 + $0x18] sm:$0xf]
      %v182 = vld [vmem:[%s166 + $0x1c] sm:$0xf]
      %v183 = vld [vmem:[%s1] sm:$0xf]
      %v184 = vld [vmem:[%s1 + $0x4] sm:$0xf]
      %v185 = vld [vmem:[%s1 + $0x8] sm:$0xf]
      %v186 = vld [vmem:[%s1 + $0xc] sm:$0xf]
      %v187 = vld [vmem:[%s2] sm:$0x1]
      %v189 = vlaneseq
      %v190 = vshrl.u32 %v189, 7
      %v191 = vsub.s32 0, %v190
      %v192 = vrot.slane %v187, %v191
      %v202 = vunpack.c.l.b16 %v175
      %v203 = vunpack.c.l.b16 %v176
      %v204 = vunpack.c.l.b16 %v177
      %v205 = vunpack.c.l.b16 %v178
      %v206 = vunpack.c.l.b16 %v179
      %v207 = vunpack.c.l.b16 %v180
      %v208 = vunpack.c.l.b16 %v181
      %v209 = vunpack.c.l.b16 %v182
      %v210 = vpack.c.b16 %v203, %v202
      %v211 = vpack.c.b16 %v205, %v204
      %v212 = vpack.c.b16 %v207, %v206
      %v213 = vpack.c.b16 %v209, %v208
      %v218 = vunpack.c.l.b16 %v183
      %v219 = vunpack.c.l.b16 %v184
      %v220 = vunpack.c.l.b16 %v185
      %v221 = vunpack.c.l.b16 %v186
      %v222 = vpack.c.b16 %v219, %v218
      %v223 = vpack.c.b16 %v221, %v220
      %vm226 = vcmask 261120
      %v228 = vsel %vm226, %v210, 0
      %v231 = vsel %vm226, %v211, 0
      %v234 = vsel %vm226, %v212, 0
      %v237 = vsel %vm226, %v213, 0
      %239 = vmatprep.subr.bf16.mxu0 0
      %240 = vmatpush1.bf16.msra.mxu0 0
      %241 = vmatprep.subr.bf16.mxu0 0
      %242 = vmatpush1.bf16.msra.mxu0 0
      %243 = vmatprep.subr.bf16.mxu0 0
      %244 = vmatpush1.bf16.msra.mxu0 0
      %245 = vmatprep.subr.bf16.mxu0 0
      %246 = vmatpush1.bf16.msra.mxu0 0
      %247 = vmatprep.subr.bf16.mxu0 0
      %248 = vmatpush1.bf16.msra.mxu0 0
      %249 = vmatprep.subr.bf16.mxu0 0
      %250 = vmatpush1.bf16.msra.mxu0 0
      %251 = vmatprep.subr.bf16.mxu0 0
      %252 = vmatpush1.bf16.msra.mxu0 %v223
      %253 = vmatprep.subr.bf16.mxu0 0
      %254 = vmatpush1.bf16.msra.mxu0 %v222
      %255 = vmatprep.subr.bf16.mxu0 0
      %256 = vmatpush2.bf16.msra.mxu0 0
      %257 = vmatprep.subr.bf16.mxu0 0
      %258 = vmatpush2.bf16.msra.mxu0 0
      %259 = vmatprep.subr.bf16.mxu0 0
      %260 = vmatpush2.bf16.msra.mxu0 0
      %261 = vmatprep.subr.bf16.mxu0 0
      %262 = vmatpush2.bf16.msra.mxu0 0
      %263 = vmatprep.subr.bf16.mxu0 0
      %264 = vmatpush2.bf16.msra.mxu0 0
      %265 = vmatprep.subr.bf16.mxu0 0
      %266 = vmatpush2.bf16.msra.mxu0 0
      %267 = vmatprep.subr.bf16.mxu0 0
      %268 = vmatpush2.bf16.msra.mxu0 0
      %269 = vmatprep.subr.bf16.mxu0 0
      %270 = vmatpush2.bf16.msra.mxu0 0
      %271 = vmatprep.mubr.bf16.mxu0 0
      %272 = vmatmul.mubr.bf16.gmra.mxu0 %v228
      %v273 = vpop.f32.mrf.mxu0
      %v274 = vadd.f32 %v192, %v273
      %v275 = vpop.f32.mrf.mxu0
      %v276 = vpop.f32.mrf.mxu0
      %v277 = vadd.f32 %v192, %v276
      %v278 = vpop.f32.mrf.mxu0
      %279 = vmatprep.mubr.bf16.mxu0 0
      %280 = vmatmul.mubr.bf16.gmra.mxu0 %v231
      %v281 = vpop.f32.mrf.mxu0
      %v282 = vadd.f32 %v192, %v281
      %v283 = vpop.f32.mrf.mxu0
      %v284 = vpop.f32.mrf.mxu0
      %v285 = vadd.f32 %v192, %v284
      %v286 = vpop.f32.mrf.mxu0
      %287 = vmatprep.mubr.bf16.mxu0 0
      %288 = vmatmul.mubr.bf16.gmra.mxu0 %v234
      %v289 = vpop.f32.mrf.mxu0
      %v290 = vadd.f32 %v192, %v289
      %v291 = vpop.f32.mrf.mxu0
      %v292 = vpop.f32.mrf.mxu0
      %v293 = vadd.f32 %v192, %v292
      %v294 = vpop.f32.mrf.mxu0
      %295 = vmatprep.mubr.bf16.mxu0 0
      %296 = vmatmul.mubr.bf16.gmra.mxu0 %v237
      %v297 = vpop.f32.mrf.mxu0
      %v298 = vadd.f32 %v192, %v297
      %v299 = vpop.f32.mrf.mxu0
      %v300 = vpop.f32.mrf.mxu0
      %v301 = vadd.f32 %v192, %v300
      %v302 = vpop.f32.mrf.mxu0
      %303 = vdwg.mxu0
      %v304 = vmax.f32 %v274, 0.0
      %v305 = vmax.f32 %v277, 0.0
      %v306 = vmax.f32 %v282, 0.0
      %v307 = vmax.f32 %v285, 0.0
      %v308 = vmax.f32 %v290, 0.0
      %v309 = vmax.f32 %v293, 0.0
      %v310 = vmax.f32 %v298, 0.0
      %v311 = vmax.f32 %v301, 0.0
      %vm312 = vcmask 64512
      %313 = vst.msk [vmem:[%s172] sm:$0xff] %vm312, %v304
      %314 = vst.msk [vmem:[%s172 + $0x8] sm:$0xff] %vm312, %v305
      %315 = vst.msk [vmem:[%s172 + $0x10] sm:$0xff] %vm312, %v306
      %316 = vst.msk [vmem:[%s172 + $0x18] sm:$0xff] %vm312, %v307
      %317 = vst.msk [vmem:[%s172 + $0x20] sm:$0xff] %vm312, %v308
      %318 = vst.msk [vmem:[%s172 + $0x28] sm:$0xff] %vm312, %v309
      %319 = vst.msk [vmem:[%s172 + $0x30] sm:$0xff] %vm312, %v310
      %320 = vst.msk [vmem:[%s172 + $0x38] sm:$0xff] %vm312, %v311
      %s321 = smul.u32 8, %s14
      %p322 = scmp.lt.s32.totalorder %s321, 31
      %s323 = scalar_select %p322, %s321, 31
      %s324 = smul.addr %s323, 8
      %s325 = scalar_lea.vmem %s3, %s324
      // Predicated region
      $region33: #{tpu_custom_call.1} parent=31 // pred_check
        %p326 = pneg %p100
      $region34: #{tpu_custom_call.1} parent=31 // pred_check_branch
        %328 = sbr.rel (%p326) target = $region36
      $region35: #{tpu_custom_call.1} parent=31 // pred_region
        %s329 = smul.u32 8, %s14
      $region36: #{tpu_custom_call.1} parent=31 // pred_fallthru
        _
    $region32: #{tpu_custom_call.1} parent=5 // pred_fallthru
      _
    %p330 = scmp.le.s32.totalorder 2, %s9
    // Predicated region
    $region37: #{tpu_custom_call.1} parent=5 // pred_check
      %p331 = pneg %p330
    $region38: #{tpu_custom_call.1} parent=5 // pred_check_branch
      %333 = sbr.rel (%p331) target = $region40
    $region39: #{tpu_custom_call.1} parent=5 // pred_region
      %s334 = ssub.s32 %s9, 2
      // Predicated region
      $region41: #{tpu_custom_call.1} parent=39 // pred_check
        %p335 = pneg %p106
      $region42: #{tpu_custom_call.1} parent=39 // pred_check_branch
        %337 = sbr.rel (%p335) target = $region44
      $region43: #{tpu_custom_call.1} parent=39 // pred_region
        %s338 = smul.u32 8, %s15
        %p339 = scmp.lt.s32.totalorder %s338, 31
        %s340 = scalar_select %p339, %s338, 31
        %s341 = smul.addr %s340, 8
        %s342 = scalar_lea.vmem %s3, %s341
      $region44: #{tpu_custom_call.1} parent=39 // pred_fallthru
        _
    $region40: #{tpu_custom_call.1} parent=5 // pred_fallthru
      _
  $region6: #{tpu_custom_call.1} parent=0 // loop_footer
    %s13 = sadd.s32 1, %s9
  $region7: #{tpu_custom_call.1} parent=0 // loop_footer_branch
    %8 = sbr.rel target = $region3
  $region8: #{tpu_custom_call.1} parent=0 // loop_exit
    _

</llo_original>
